<compile_context>
chip_gen: v5e
topology: v5e:2x2
jax: 0.10.0
libtpu: 0.0.40
codegen_flags: <defaults>
</compile_context>

<pallas_src>
import functools
import numpy as np
import jax
import jax.numpy as jnp
from jax.experimental import pallas as pl
from jax.experimental.pallas import tpu as pltpu


def _round_up(v, m):
    return (v + m - 1) // m * m


@functools.lru_cache(maxsize=None)
def _tpu_defaults():
    """(max_tile_m, vmem_limit_bytes) picked per TPU generation.

    128-MiB-VMEM parts (v5e/v6e) get 512-row tiles (~85% of HBM roofline measured);
    64-MiB parts (v7x) stay at 256 rows so double-buffered blocks still fit.
    """
    vmem = 64 * 1024 * 1024
    try:
        vmem = pltpu.get_tpu_info().vmem_capacity_bytes
    except Exception:
        pass
    if vmem >= 100 * 1024 * 1024:
        return 512, 64 * 1024 * 1024
    return 256, 40 * 1024 * 1024


def _pick_tile(M, max_tile, min_tile=128):
    """Largest row-tile <= max_tile that divides M (no pad/slice HBM round-trips).

    If M <= max_tile the whole axis is one block; if no multiple-of-8 divisor
    >= min_tile exists, return max_tile and let the caller use a cdiv grid.
    """
    if M <= max_tile:
        return M
    t = (max_tile // 8) * 8
    while t >= min_tile:
        if M % t == 0:
            return t
        t -= 8
    return (max_tile // 8) * 8


# ----------------------------- in-kernel helpers ----------------------------

_SQRT1_2 = 0.7071067811865476


def _erf_poly(x):
    # Abramowitz-Stegun 7.1.26 rational approximation of erf (|err| < 1.5e-7),
    # built only from exp/mul/add/select so it always lowers in Mosaic; the exp
    # lands on the EUP slot which is otherwise idle next to the MXU.
    a1, a2, a3, a4, a5 = 0.254829592, -0.284496736, 1.421413741, -1.453152027, 1.061405429
    pc = 0.3275911
    s = jnp.where(x >= 0.0, 1.0, -1.0)
    z = jnp.abs(x)
    t = 1.0 / (1.0 + pc * z)
    poly = ((((a5 * t + a4) * t + a3) * t + a2) * t + a1) * t
    return s * (1.0 - poly * jnp.exp(-z * z))


def _gelu_exact(x):
    # matches torch.nn.GELU() (exact erf formulation) to ~1e-7
    return 0.5 * x * (1.0 + _erf_poly(x * _SQRT1_2))


# ----------------------------- Pallas kernels ------------------------------

def _fused_linear_kernel(*refs, ln, act, residual, eps):
    # ref order: x, w(bf16), b, [ln_g, ln_b], [res], out
    idx = 0
    x_ref = refs[idx]; idx += 1
    w_ref = refs[idx]; idx += 1
    b_ref = refs[idx]; idx += 1
    if ln:
        g_ref = refs[idx]; idx += 1
        bb_ref = refs[idx]; idx += 1
    if residual:
        r_ref = refs[idx]; idx += 1
    o_ref = refs[idx]

    x = x_ref[...]                                      # (tm, K) bf16 or f32
    if ln:                                              # LayerNorm prologue (f32)
        x = x.astype(jnp.float32)
        mu = jnp.mean(x, axis=-1, keepdims=True)
        var = jnp.mean((x - mu) ** 2, axis=-1, keepdims=True)   # biased, like torch LN
        x = (x - mu) * jax.lax.rsqrt(var + eps) * g_ref[...] + bb_ref[...]
    # bf16 MXU matmul, f32 accumulate
    y = jnp.dot(x.astype(jnp.bfloat16), w_ref[...],
                preferred_element_type=jnp.float32) + b_ref[...]
    if act == "gelu":                                   # fused exact-GELU epilogue
        y = _gelu_exact(y)
    if residual:                                        # fused residual epilogue (f32)
        y = y + r_ref[...].astype(jnp.float32)
    o_ref[...] = y.astype(o_ref.dtype)


def fused_linear(x, w, b, *, ln=None, act=None, residual=None,
                 out_dtype=jnp.float32, tile_m=None, eps=1e-6):
    """(optional LN) -> x @ w + b -> (optional GELU) -> (optional +residual).

    Token (M) axis tiled with a grid (double-buffered HBM<->VMEM pipeline); weights
    are bf16 and resident per step; the tile is a divisor of M whenever possible so
    there is no pad/slice HBM round-trip.  Output dtype is configurable (bf16 for
    tensors that only feed another matmul).
    """
    lead = x.shape[:-1]
    K = x.shape[-1]
    N = w.shape[-1]
    x2 = x.reshape(-1, K)
    M = x2.shape[0]

    max_tm, vmem_limit = _tpu_defaults()
    if tile_m is not None:
        max_tm = tile_m
    tm = _pick_tile(M, max_tm)
    grid = pl.cdiv(M, tm)   # ragged last block (if any): garbage rows stay contained,
                            # OOB output rows are dropped by Pallas on writeback.

    args = [x2, w, b.reshape(1, N)]
    in_specs = [
        pl.BlockSpec((tm, K), lambda i: (i, 0)),
        # TODO(synk): pipeline_mode=pl.Buffered(1) on these constant-index blocks to
        #             save one weight copy of VMEM on v7x once exercised in CI.
        pl.BlockSpec((K, N), lambda i: (0, 0)),
        pl.BlockSpec((1, N), lambda i: (0, 0)),
    ]
    if ln is not None:
        g, bb = ln
        args += [g.reshape(1, K), bb.reshape(1, K)]
        in_specs += [pl.BlockSpec((1, K), lambda i: (0, 0)),
                     pl.BlockSpec((1, K), lambda i: (0, 0))]
    r2 = None
    if residual is not None:
        r2 = residual.reshape(-1, N)
        args.append(r2)
        in_specs.append(pl.BlockSpec((tm, N), lambda i: (i, 0)))

    out_isz = np.dtype(out_dtype).itemsize
    bytes_accessed = (x2.size * x2.dtype.itemsize + w.size * w.dtype.itemsize
                      + M * N * out_isz
                      + (r2.size * r2.dtype.itemsize if r2 is not None else 0))
    out = pl.pallas_call(
        functools.partial(_fused_linear_kernel, ln=ln is not None, act=act,
                          residual=r2 is not None, eps=eps),
        out_shape=jax.ShapeDtypeStruct((M, N), out_dtype),
        grid=(grid,),
        in_specs=in_specs,
        out_specs=pl.BlockSpec((tm, N), lambda i: (i, 0)),
        compiler_params=pltpu.CompilerParams(
            dimension_semantics=("parallel",),           # megacore sharding on v7x
            vmem_limit_bytes=vmem_limit),
        cost_estimate=pl.CostEstimate(
            flops=2 * M * K * N,
            transcendentals=M * N if act == "gelu" else 0,
            bytes_accessed=bytes_accessed),
    )(*args)
    return out.reshape(*lead, N)


def _attn_kernel(qkv_ref, o_ref, *, num_heads):
    # qkv block: (bb, N, 3C) lane-dense bf16; the dh**-0.5 scale is pre-folded into
    # the q columns of the qkv projection, so there is no per-head multiply here.
    qkv = qkv_ref[...]
    C3 = qkv.shape[-1]
    C = C3 // 3
    dh = C // num_heads
    for h in range(num_heads):                           # static unroll over heads
        # TODO(synk): pad per-head lanes to 128 for dh<128 models to avoid masked
        #             lane slices/stores (not worth it at these test sizes).
        q = qkv[:, :, h * dh:(h + 1) * dh].astype(jnp.bfloat16)
        k = qkv[:, :, C + h * dh:C + (h + 1) * dh].astype(jnp.bfloat16)
        v = qkv[:, :, 2 * C + h * dh:2 * C + (h + 1) * dh].astype(jnp.bfloat16)
        s = jnp.einsum("bnd,bmd->bnm", q, k,
                       preferred_element_type=jnp.float32)       # (bb, N, N) f32
        s = s - jnp.max(s, axis=-1, keepdims=True)
        p = jnp.exp(s)
        p = p * pl.reciprocal(jnp.sum(p, axis=-1, keepdims=True), approx=True)
        o = jnp.einsum("bnm,bmd->bnd", p.astype(jnp.bfloat16), v,
                       preferred_element_type=jnp.float32)        # (bb, N, dh) f32
        # write each head's result straight into its lane slice (no concatenate pass)
        o_ref[:, :, h * dh:(h + 1) * dh] = o.astype(o_ref.dtype)


def _pick_batch_block(B, max_bb=8):
    divs = [d for d in range(1, min(B, max_bb) + 1) if B % d == 0]
    even = [d for d in divs if (B // d) % 2 == 0]     # even grid keeps both v7x TCs busy
    return max(even) if even else max(divs)


def attention(qkv, num_heads, out_dtype=jnp.bfloat16):
    """qkv: (B, N, 3C) packed lane-dense bf16 -> (B, N, C) bf16."""
    # TODO(synk): flash-style KV tiling for sequences >> 1K tokens (not needed for MAE).
    B, N, C3 = qkv.shape
    C = C3 // 3
    bb = _pick_batch_block(B)
    _, vmem_limit = _tpu_defaults()
    return pl.pallas_call(
        functools.partial(_attn_kernel, num_heads=num_heads),
        out_shape=jax.ShapeDtypeStruct((B, N, C), out_dtype),
        grid=(B // bb,),
        in_specs=[pl.BlockSpec((bb, N, C3), lambda b: (b, 0, 0))],
        out_specs=pl.BlockSpec((bb, N, C), lambda b: (b, 0, 0)),
        compiler_params=pltpu.CompilerParams(
            dimension_semantics=("parallel",),
            vmem_limit_bytes=vmem_limit),
    )(qkv)


def vit_block(x, p, num_heads):
    # x = x + Proj(Attn(LN1(x)));  x = x + FC2(GELU(FC1(LN2(x))))   -- all fused.
    # Matmul-feeding intermediates (qkv slab, attn out, fc1/GELU out) travel as bf16;
    # the residual stream stays f32.
    qkv = fused_linear(x, p["qkv_w"], p["qkv_b"], ln=(p["ln1_g"], p["ln1_b"]),
                       out_dtype=jnp.bfloat16)
    a = attention(qkv, num_heads)
    x = fused_linear(a, p["proj_w"], p["proj_b"], residual=x, out_dtype=jnp.float32)
    h = fused_linear(x, p["fc1_w"], p["fc1_b"], ln=(p["ln2_g"], p["ln2_b"]),
                     act="gelu", out_dtype=jnp.bfloat16)
    x = fused_linear(h, p["fc2_w"], p["fc2_b"], residual=x, out_dtype=jnp.float32)
    return x


def _mae_loss_kernel(pred_ref, tgt_ref, mask_ref, o_ref, num_ref, den_ref, *, norm_pix):
    @pl.when(pl.program_id(0) == 0)
    def _():
        num_ref[...] = jnp.zeros_like(num_ref)
        den_ref[...] = jnp.zeros_like(den_ref)

    tgt = tgt_ref[...]
    if norm_pix:
        mean = jnp.mean(tgt, axis=-1, keepdims=True)
        # torch .var() default is unbiased (N-1)
        var = jnp.sum((tgt - mean) ** 2, axis=-1, keepdims=True) / (tgt.shape[-1] - 1)
        tgt = (tgt - mean) * jax.lax.rsqrt(var + 1e-6)
    l = jnp.mean((pred_ref[...] - tgt) ** 2, axis=-1, keepdims=True)   # (tr, 1)
    m = mask_ref[...]                                                   # (tr, 1)
    num_ref[...] += jnp.sum(l * m, axis=(0, 1), keepdims=True)
    den_ref[...] += jnp.sum(m, axis=(0, 1), keepdims=True)

    @pl.when(pl.program_id(0) == pl.num_programs(0) - 1)
    def _():
        o_ref[...] = num_ref[...] / den_ref[...]


def mae_loss(pred, target, mask, *, norm_pix, tile_r=512):
    B, L, P = pred.shape
    R = B * L
    pred2 = pred.reshape(R, P).astype(jnp.float32)
    tgt2 = target.reshape(R, P).astype(jnp.float32)
    m2 = mask.reshape(R, 1)
    tr = _pick_tile(R, tile_r, min_tile=64)
    Rp = R
    if R % tr != 0:                   # rare fallback; zero-padded rows have mask==0
        Rp = _round_up(R, tr)
        pred2 = jnp.pad(pred2, ((0, Rp - R), (0, 0)))
        tgt2 = jnp.pad(tgt2, ((0, Rp - R), (0, 0)))
        m2 = jnp.pad(m2, ((0, Rp - R), (0, 0)))
    _, vmem_limit = _tpu_defaults()
    out = pl.pallas_call(
        functools.partial(_mae_loss_kernel, norm_pix=norm_pix),
        out_shape=jax.ShapeDtypeStruct((1, 1), jnp.float32),
        grid=(Rp // tr,),
        in_specs=[pl.BlockSpec((tr, P), lambda i: (i, 0)),
                  pl.BlockSpec((tr, P), lambda i: (i, 0)),
                  pl.BlockSpec((tr, 1), lambda i: (i, 0))],
        out_specs=pl.BlockSpec((1, 1), lambda i: (0, 0)),
        scratch_shapes=[pltpu.VMEM((1, 1), jnp.float32),
                        pltpu.VMEM((1, 1), jnp.float32)],
        compiler_params=pltpu.CompilerParams(
            dimension_semantics=("arbitrary",),
            vmem_limit_bytes=vmem_limit),
    )(pred2, tgt2, m2)
    return out[0, 0]


# ---------------------------- parameter init --------------------------------

def _sincos_1d(embed_dim, pos):
    omega = np.arange(embed_dim // 2, dtype=np.float64) / (embed_dim / 2.0)
    omega = 1.0 / 10000 ** omega
    out = np.einsum("m,d->md", pos.reshape(-1).astype(np.float64), omega)
    return np.concatenate([np.sin(out), np.cos(out)], axis=1)


def get_2d_sincos_pos_embed(embed_dim, grid_size, cls_token=True):
    grid_h = np.arange(grid_size, dtype=np.float32)
    grid_w = np.arange(grid_size, dtype=np.float32)
    grid = np.meshgrid(grid_w, grid_h)
    grid = np.stack(grid, axis=0).reshape(2, 1, grid_size, grid_size)
    emb_h = _sincos_1d(embed_dim // 2, grid[0])
    emb_w = _sincos_1d(embed_dim // 2, grid[1])
    pos = np.concatenate([emb_h, emb_w], axis=1)
    if cls_token:
        pos = np.concatenate([np.zeros([1, embed_dim]), pos], axis=0)
    return pos.astype(np.float32)


def init_params(key, *, embed_dim, depth, num_heads, dec_dim, dec_depth,
                dec_num_heads, patch_size, in_chans, grid_size, mlp_ratio=4):
    keys = iter(jax.random.split(key, 256))

    def w_mm(shape, std=0.02):   # matmul weights live in bf16 (MXU-native, half DMA)
        return (jax.random.normal(next(keys), shape, jnp.float32) * std).astype(jnp.bfloat16)

    def w_f32(shape, std=0.02):
        return jax.random.normal(next(keys), shape, jnp.float32) * std

    def blk(dim, heads):
        hidden = dim * mlp_ratio
        scale = (dim // heads) ** -0.5
        # fold the attention scale (dh**-0.5) into the q columns -- free at init,
        # removes the per-head VPU multiply inside the attention kernel.
        qkv_w = jax.random.normal(next(keys), (dim, 3 * dim), jnp.float32) * 0.02
        qkv_w = qkv_w.at[:, :dim].multiply(scale).astype(jnp.bfloat16)
        qkv_b = jnp.zeros((3 * dim,), jnp.float32).at[:dim].multiply(scale)
        return dict(
            ln1_g=jnp.ones((dim,), jnp.float32), ln1_b=jnp.zeros((dim,), jnp.float32),
            qkv_w=qkv_w, qkv_b=qkv_b,
            proj_w=w_mm((dim, dim)), proj_b=jnp.zeros((dim,), jnp.float32),
            ln2_g=jnp.ones((dim,), jnp.float32), ln2_b=jnp.zeros((dim,), jnp.float32),
            fc1_w=w_mm((dim, hidden)), fc1_b=jnp.zeros((hidden,), jnp.float32),
            fc2_w=w_mm((hidden, dim)), fc2_b=jnp.zeros((dim,), jnp.float32),
        )

    patch_dim = in_chans * patch_size * patch_size
    return dict(
        patch_w=w_mm((patch_dim, embed_dim)), patch_b=jnp.zeros((embed_dim,), jnp.float32),
        pos_embed=jnp.asarray(get_2d_sincos_pos_embed(embed_dim, grid_size))[None],
        cls_token=w_f32((1, 1, embed_dim)),
        enc_blocks=[blk(embed_dim, num_heads) for _ in range(depth)],
        enc_norm_g=jnp.ones((embed_dim,), jnp.float32),
        enc_norm_b=jnp.zeros((embed_dim,), jnp.float32),
        dec_embed_w=w_mm((embed_dim, dec_dim)), dec_embed_b=jnp.zeros((dec_dim,), jnp.float32),
        mask_token=w_f32((1, 1, dec_dim)),
        dec_pos_embed=jnp.asarray(get_2d_sincos_pos_embed(dec_dim, grid_size))[None],
        dec_blocks=[blk(dec_dim, dec_num_heads) for _ in range(dec_depth)],
        dec_norm_g=jnp.ones((dec_dim,), jnp.float32),
        dec_norm_b=jnp.zeros((dec_dim,), jnp.float32),
        dec_pred_w=w_mm((dec_dim, patch_dim)),
        dec_pred_b=jnp.zeros((patch_dim,), jnp.float32),
    )


# ----------------------------- MAE forward ----------------------------------

def ptmae_forward_train(params, img, mask_key, *, mask_ratio, num_heads,
                        dec_num_heads, patch_size, norm_pix_loss=True):
    B, C, H, W = img.shape
    p = patch_size
    h, w = H // p, W // p
    L = h * w

    xr = img.reshape(B, C, h, p, w, p)
    # patch-embed conv == matmul with weight flattened in (c, i, j) order; emit bf16
    # so the patchified slab is written/read at half the bytes.
    patches_conv = jnp.transpose(xr, (0, 2, 4, 1, 3, 5)).reshape(
        B, L, C * p * p).astype(jnp.bfloat16)
    # MAE patchify target uses (p, q, c) ordering: 'nchpwq->nhwpqc'  (f32 for the loss)
    target = jnp.transpose(xr, (0, 2, 4, 3, 5, 1)).reshape(B, L, p * p * C)

    # ---------------- encoder ----------------
    x = fused_linear(patches_conv, params["patch_w"], params["patch_b"],
                     out_dtype=jnp.bfloat16)                           # (B, L, D) bf16
    # TODO(synk): fold the pos-embed adds into the adjacent linear's epilogue with a
    #             per-token BlockSpec instead of a standalone XLA add.
    x = x + params["pos_embed"][:, 1:, :].astype(jnp.bfloat16)

    # random masking (sort/gather are plain-JAX glue)
    len_keep = int(L * (1 - mask_ratio))
    noise = jax.random.uniform(mask_key, (B, L))
    ids_shuffle = jnp.argsort(noise, axis=1)
    ids_restore = jnp.argsort(ids_shuffle, axis=1)
    ids_keep = ids_shuffle[:, :len_keep]
    x = jnp.take_along_axis(x, ids_keep[:, :, None], axis=1)
    mask = jnp.ones((B, L), jnp.float32).at[:, :len_keep].set(0.0)
    mask = jnp.take_along_axis(mask, ids_restore, axis=1)              # 1 = removed

    cls = (params["cls_token"] + params["pos_embed"][:, :1, :]).astype(jnp.bfloat16)
    x = jnp.concatenate([jnp.broadcast_to(cls, (B, 1, x.shape[-1])), x], axis=1)

    for blk in params["enc_blocks"]:
        x = vit_block(x, blk, num_heads)
    # final encoder norm fused into the decoder-embed projection (bf16: feeds gathers
    # and the decoder's first matmul)
    x = fused_linear(x, params["dec_embed_w"], params["dec_embed_b"],
                     ln=(params["enc_norm_g"], params["enc_norm_b"]),
                     out_dtype=jnp.bfloat16)

    # ---------------- decoder ----------------
    Dd = x.shape[-1]
    n_mask = L + 1 - x.shape[1]
    mask_tokens = jnp.broadcast_to(params["mask_token"].astype(jnp.bfloat16),
                                   (B, n_mask, Dd))
    x_ = jnp.concatenate([x[:, 1:, :], mask_tokens], axis=1)
    x_ = jnp.take_along_axis(x_, ids_restore[:, :, None], axis=1)      # unshuffle
    x = jnp.concatenate([x[:, :1, :], x_], axis=1)
    x = x + params["dec_pos_embed"].astype(jnp.bfloat16)
    for blk in params["dec_blocks"]:
        x = vit_block(x, blk, dec_num_heads)
    # decoder norm + prediction fused; drop cls BEFORE the matmul (no wasted work)
    pred = fused_linear(x[:, 1:, :], params["dec_pred_w"], params["dec_pred_b"],
                        ln=(params["dec_norm_g"], params["dec_norm_b"]),
                        out_dtype=jnp.float32)                          # (B, L, p*p*C)

    # ---------------- loss (norm-pix MSE on masked patches) ----------------
    loss = mae_loss(pred, target, mask, norm_pix=norm_pix_loss)
    return {"loss": loss}


# --------------------------------- main --------------------------------------

if __name__ == "__main__":
    key = jax.random.PRNGKey(0)
    k_img, k_params, k_mask = jax.random.split(key, 3)

    # small-but-consistent MAE config
    B, C, H, W = 2, 3, 16, 16
    patch_size = 4
    embed_dim, depth, num_heads = 32, 2, 4
    dec_dim, dec_depth, dec_num_heads = 32, 1, 4
    mask_ratio = 0.75

    img = jax.random.normal(k_img, (B, C, H, W), jnp.float32)
    params = init_params(
        k_params,
        embed_dim=embed_dim, depth=depth, num_heads=num_heads,
        dec_dim=dec_dim, dec_depth=dec_depth, dec_num_heads=dec_num_heads,
        patch_size=patch_size, in_chans=C, grid_size=H // patch_size,
    )

    out = ptmae_forward_train(
        params, img, k_mask,
        mask_ratio=mask_ratio, num_heads=num_heads,
        dec_num_heads=dec_num_heads, patch_size=patch_size,
    )
    loss = jax.block_until_ready(out["loss"])
    assert jnp.isfinite(loss), "loss is not finite"
    print("KERNEL_OK")
</pallas_src>

<mosaic_0001>
module attributes {stable_mosaic.version = 11 : i64} {
  func.func @_fused_linear_kernel(%arg0: i32, %arg1: memref<32x48xbf16, #tpu.memory_space<vmem>>, %arg2: memref<48x32xbf16, #tpu.memory_space<vmem>>, %arg3: memref<1x32xf32, #tpu.memory_space<vmem>>, %arg4: memref<32x32xbf16, #tpu.memory_space<vmem>>) attributes {dimension_semantics = [#tpu.dimension_semantics<parallel>], iteration_bounds = array<i64: 1>, scalar_prefetch = 0 : i64, scratch_operands = 0 : i64, tpu.core_type = #tpu.core_type<tc>, window_params = [{transform_indices = @transform_0, window_bounds = array<i64: 32, 48>}, {pipeline_mode = #tpu.pipeline_mode<synchronous>, transform_indices = @transform_1, window_bounds = array<i64: 48, 32>}, {pipeline_mode = #tpu.pipeline_mode<synchronous>, transform_indices = @transform_2, window_bounds = array<i64: 1, 32>}, {transform_indices = @transform_3, window_bounds = array<i64: 32, 32>}]} {
    %c0 = arith.constant 0 : index
    %c0_0 = arith.constant 0 : index
    %0 = vector.load %arg1[%c0, %c0_0] : memref<32x48xbf16, #tpu.memory_space<vmem>>, vector<32x48xbf16>
    %c0_1 = arith.constant 0 : index
    %c0_2 = arith.constant 0 : index
    %1 = vector.load %arg2[%c0_1, %c0_2] : memref<48x32xbf16, #tpu.memory_space<vmem>>, vector<48x32xbf16>
    %cst = arith.constant dense<0.000000e+00> : vector<32x32xf32>
    %2 = tpu.matmul %0, %1, %cst {dimension_numbers = #tpu.dot_dimension_numbers<[1], [0], [0], [1], [0, 0, 1, 1], [], []>} : vector<32x48xbf16>, vector<48x32xbf16>, vector<32x32xf32> -> vector<32x32xf32>
    %c0_3 = arith.constant 0 : index
    %c0_4 = arith.constant 0 : index
    %3 = vector.load %arg3[%c0_3, %c0_4] : memref<1x32xf32, #tpu.memory_space<vmem>>, vector<1x32xf32>
    %4 = vector.broadcast %3 : vector<1x32xf32> to vector<32x32xf32>
    %5 = arith.addf %2, %4 : vector<32x32xf32>
    %6 = arith.truncf %5 : vector<32x32xf32> to vector<32x32xbf16>
    %c0_5 = arith.constant 0 : index
    %c0_6 = arith.constant 0 : index
    %7 = vector.load %arg4[%c0_5, %c0_6] : memref<32x32xbf16, #tpu.memory_space<vmem>>, vector<32x32xbf16>
    tpu.vector_store %arg4[%c0_5, %c0_6], %6 {strides = array<i32>} : memref<32x32xbf16, #tpu.memory_space<vmem>>, vector<32x32xbf16>,
    return
  }
  func.func @transform_0(%arg0: i32) -> (i32, i32) {
    %c0_i32 = arith.constant 0 : i32
    %c0_i32_0 = arith.constant 0 : i32
    return %arg0, %c0_i32 : i32, i32
  }
  func.func @transform_1(%arg0: i32) -> (i32, i32) {
    %c0_i32 = arith.constant 0 : i32
    %c0_i32_0 = arith.constant 0 : i32
    %c0_i32_1 = arith.constant 0 : i32
    return %c0_i32, %c0_i32_0 : i32, i32
  }
  func.func @transform_2(%arg0: i32) -> (i32, i32) {
    %c0_i32 = arith.constant 0 : i32
    %c0_i32_0 = arith.constant 0 : i32
    %c0_i32_1 = arith.constant 0 : i32
    return %c0_i32, %c0_i32_0 : i32, i32
  }
  func.func @transform_3(%arg0: i32) -> (i32, i32) {
    %c0_i32 = arith.constant 0 : i32
    %c0_i32_0 = arith.constant 0 : i32
    return %arg0, %c0_i32 : i32, i32
  }
}

</mosaic_0001>

<llo_original>
// kernel: tpu_custom_call.1
$region0: #{tpu_custom_call.1}
  #allocation0 [shape = 'u32[]', space=smem, size = 0x4, offset = 0x4, fixed_abs, tag = 'smem constant byte address 0x4 - core index']
  #allocation1 [shape = 'u32[72,128]{1,0:T(1,128)}', space=vmem, size = 0x9000, scoped, tag = 'internal scratch']
  %s0 = inlined_call_operand.vmem [shape: bf16[32,48], index: 0, kind: input, shape index: {}]
  %s1 = inlined_call_operand.vmem [shape: bf16[48,32], index: 1, kind: input, shape index: {}]
  %s2 = inlined_call_operand.vmem [shape: f32[1,32], index: 2, kind: input, shape index: {}]
  %s3 = inlined_call_operand.hbm [shape: bf16[32,32], index: 3, kind: output, shape index: {}]
  %s4 = sld [smem:[#allocation0]]
  $region22: #{tpu_custom_call.1} parent=0
    _
  %s6 = ssub.s32 1, %s4
  %s7 = scalar_select 0, %s6, %s4
  $region1: #{tpu_custom_call.1} parent=0
    #allocation2 [shape = 'u8[8192]{0}', space=vmem, size = 0x2000, scoped, tag = 'output window, operand 0, single buffered']
    #allocation3 [shape = 's32[1]{0}', space=sflag, size = 0x4, scoped, tag = 'scoped memory for tpu_custom_call.1']
    %8 = vsyncpa [#allocation3], 0
    // Predicated region
    $region2: #{tpu_custom_call.1} parent=1 // pred_check
      _
    $region3: #{tpu_custom_call.1} parent=1 // pred_check_branch
      %10 = sbr.rel (0) target = $region5
    $region4: #{tpu_custom_call.1} parent=1 // pred_region
      _
    $region5: #{tpu_custom_call.1} parent=1 // pred_fallthru
      _
    // Predicated region
    $region6: #{tpu_custom_call.1} parent=1 // pred_check
      _
    $region7: #{tpu_custom_call.1} parent=1 // pred_check_branch
      %12 = sbr.rel (0) target = $region9
    $region8: #{tpu_custom_call.1} parent=1 // pred_region
      _
    $region9: #{tpu_custom_call.1} parent=1 // pred_fallthru
      _
    // Predicated region
    $region10: #{tpu_custom_call.1} parent=1 // pred_check
      _
    $region11: #{tpu_custom_call.1} parent=1 // pred_check_branch
      %14 = sbr.rel (0) target = $region13
    $region12: #{tpu_custom_call.1} parent=1 // pred_region
      _
    $region13: #{tpu_custom_call.1} parent=1 // pred_fallthru
      _
    %v16 = vld [vmem:[%s0] sm:$0xf]
    %v17 = vld [vmem:[%s0 + $0x4] sm:$0xf]
    %v18 = vld [vmem:[%s0 + $0x8] sm:$0xf]
    %v19 = vld [vmem:[%s0 + $0xc] sm:$0xf]
    %v20 = vld [vmem:[%s1] sm:$0xf]
    %v21 = vld [vmem:[%s1 + $0x4] sm:$0xf]
    %v22 = vld [vmem:[%s1 + $0x8] sm:$0xf]
    %v23 = vld [vmem:[%s1 + $0xc] sm:$0xf]
    %v24 = vld [vmem:[%s1 + $0x10] sm:$0xf]
    %v25 = vld [vmem:[%s1 + $0x14] sm:$0xf]
    %v26 = vld [vmem:[%s2] sm:$0x1]
    %v28 = vperm.slane %v26, 0
    %v34 = vunpack.c.l.b16 %v16
    %v35 = vunpack.c.l.b16 %v17
    %v36 = vunpack.c.l.b16 %v18
    %v37 = vunpack.c.l.b16 %v19
    %v38 = vpack.c.b16 %v35, %v34
    %v39 = vpack.c.b16 %v37, %v36
    %v46 = vunpack.c.l.b16 %v20
    %v47 = vunpack.c.l.b16 %v21
    %v48 = vunpack.c.l.b16 %v22
    %v49 = vunpack.c.l.b16 %v23
    %v50 = vunpack.c.l.b16 %v24
    %v51 = vunpack.c.l.b16 %v25
    %v52 = vpack.c.b16 %v47, %v46
    %v53 = vpack.c.b16 %v49, %v48
    %v54 = vpack.c.b16 %v51, %v50
    %vm58 = vcmask 392192
    %v60 = vsel %vm58, %v38, 0
    %v63 = vsel %vm58, %v39, 0
    %65 = vmatpush.bf16.msra.mxu0 0
    %66 = vmatpush.bf16.msra.mxu0 0
    %67 = vmatpush.bf16.msra.mxu0 0
    %68 = vmatpush.bf16.msra.mxu0 0
    %69 = vmatpush.bf16.msra.mxu0 0
    %70 = vmatpush.bf16.msra.mxu0 %v54
    %71 = vmatpush.bf16.msra.mxu0 %v53
    %72 = vmatpush.bf16.msra.mxu0 %v52
    %73 = vmatmul.bf16.gmra.mxu0 %v60
    %v74 = vpop.f32.mrf.mxu0
    %v75 = vadd.f32 %v28, %v74
    %v76 = vpop.f32.mrf.mxu0
    %v77 = vadd.f32 %v28, %v76
    %78 = vmatmul.bf16.gmra.mxu0 %v63
    %v79 = vpop.f32.mrf.mxu0
    %v80 = vadd.f32 %v28, %v79
    %v81 = vpop.f32.mrf.mxu0
    %v82 = vadd.f32 %v28, %v81
    %83 = vdwg.mxu0
    %v84 = vpack.c.bf16 %v75, %v75
    %v85 = vpack.c.bf16 %v77, %v77
    %v86 = vpack.c.bf16 %v80, %v80
    %v87 = vpack.c.bf16 %v82, %v82
    %vm88 = vcmask 257024
    %89 = vst.msk [vmem:[#allocation2] sm:$0xf] %vm88, %v84
    %90 = vst.msk [vmem:[#allocation2 + $0x4] sm:$0xf] %vm88, %v85
    %91 = vst.msk [vmem:[#allocation2 + $0x8] sm:$0xf] %vm88, %v86
    %92 = vst.msk [vmem:[#allocation2 + $0xc] sm:$0xf] %vm88, %v87
    // Predicated region
    $region14: #{tpu_custom_call.1} parent=1 // pred_check
      _
    $region15: #{tpu_custom_call.1} parent=1 // pred_check_branch
      %94 = sbr.rel (0) target = $region17
    $region16: #{tpu_custom_call.1} parent=1 // pred_region
      %96 = vsyncadd [#allocation3], 0
      %s97 = sshll.u32 [#allocation2], 4
      %s98 = int_to_ptr.vmem [resolvable:$true] %s97
      %s99 = sshll.u32 %s3, 4
      %s100 = int_to_ptr.hbm [resolvable:$true] %s99
      %105 = dma.vmem_to_hbm [thread:$0]  %s98, 256, %s100, [#allocation3], 64, 64, 4
    $region17: #{tpu_custom_call.1} parent=1 // pred_fallthru
      _
    // Predicated region
    $region18: #{tpu_custom_call.1} parent=1 // pred_check
      _
    $region19: #{tpu_custom_call.1} parent=1 // pred_check_branch
      %107 = sbr.rel (0) target = $region21
    $region20: #{tpu_custom_call.1} parent=1 // pred_region
      %109 = dma.done [#allocation3], 256
    $region21: #{tpu_custom_call.1} parent=1 // pred_fallthru
      _
    %110 = vsyncpa [#allocation3], 1

</llo_original>
